<compile_context>
chip_gen: v6e
topology: v6e:2x2x1
jax: 0.10.0
libtpu: 0.0.40
codegen_flags: <defaults>
</compile_context>

<pallas_src>
import math

import jax
import jax.numpy as jnp
from jax.experimental import pallas as pl
from jax.experimental.pallas import tpu as pltpu


def _pe_kernel(a_ref, b_ref, sel_ref, o_ref):
    """One row-tile of the positional-encoding grid.

    a_ref:   (2C, tile_s)  [sin(A); cos(A)] column tables, pre-tiled along the
                           flat lane axis (tile-invariant -> DMA'd only once).
    b_ref:   (1, 2C, th)   [sin(B); cos(B)] row tables for this tile's rows.
    sel_ref: (th, tile_s)  one-hot "repeat each row value W times along lanes"
                           selection matrix (tile-invariant -> DMA'd only once).
    o_ref:   (2C, tile_s)  output row-tile (channels on sublanes, h*W+w lanes).
    """
    two_c = o_ref.shape[0]
    c = two_c // 2

    sin_a = a_ref[:c, :]
    cos_a = a_ref[c:, :]

    # Lane-broadcast of the per-row tables via a tiny one-hot matmul (MXU is
    # idle otherwise; K = th is negligible work and avoids any VALU/relayout).
    b = b_ref[0]                                                   # (2C, th)
    bb = jnp.dot(b, sel_ref[...], preferred_element_type=jnp.float32)
    sin_b = bb[:c, :]
    cos_b = bb[c:, :]

    # Angle-addition identities: ~3 VPU ops / output element, no transcendentals.
    o_ref[:c, :] = (sin_a * cos_b + cos_a * sin_b).astype(o_ref.dtype)   # sin(A+B)
    o_ref[c:, :] = (cos_a * cos_b - sin_a * sin_b).astype(o_ref.dtype)   # cos(A+B)


def _choose_th(H, W, two_c, *, max_block_bytes=2 << 20, target_steps=4,
               multistep_min_out_bytes=256 << 10):
    """Pick a row-tile height th (divisor of H).

    Legal blocks: flat lane width th*W is a multiple of 128, or th == H.
    For outputs >= ~256 KiB keep >= target_steps grid steps (2+ per v7x core,
    and a next iteration for writeback to hide behind); otherwise take the
    largest block within the (v7x-safe) VMEM budget.
    """
    bytes_per_row = two_c * W * 4
    total_bytes = H * bytes_per_row
    cands = [th for th in range(1, H + 1)
             if H % th == 0 and ((th * W) % 128 == 0 or th == H)]
    within = [th for th in cands if th * bytes_per_row <= max_block_bytes]
    if not within:
        # Pathological shapes: smallest legal block; caller sizes vmem_limit
        # from the actual block so this no longer silently overshoots.
        return cands[0]
    if total_bytes >= multistep_min_out_bytes:
        multi = [th for th in within if H // th >= target_steps]
        if multi:
            return multi[-1]
        two_step = [th for th in within if H // th >= 2]
        if two_step:
            return two_step[-1]
    return within[-1]


def position_embedding_random(gaussian_matrix, size, *, out_dtype=jnp.float32,
                              max_block_bytes=2 << 20):
    """Equivalent of PositionEmbeddingRandom.forward(size). Returns (2C, H, W)."""
    H, W = size
    C = gaussian_matrix.shape[1]
    two_c = 2 * C

    th = _choose_th(H, W, two_c, max_block_bytes=max_block_bytes)
    tile_s = th * W
    grid_n = H // th

    # --- tiny per-axis tables (C*(H+W) transcendentals total, built in XLA) ---
    g = gaussian_matrix.astype(jnp.float32)
    gx = g[0].reshape(C, 1)                                   # (C, 1)
    gy = g[1].reshape(C, 1)                                   # (C, 1)
    two_pi = jnp.float32(2.0 * math.pi)
    xs = (jnp.arange(W, dtype=jnp.float32) + 0.5) / W * 2.0 - 1.0   # (W,)
    ys = (jnp.arange(H, dtype=jnp.float32) + 0.5) / H * 2.0 - 1.0   # (H,)
    A = two_pi * gx * xs[None, :]                             # (C, W)
    B = two_pi * gy * ys[None, :]                             # (C, H)
    a_tab = jnp.concatenate([jnp.sin(A), jnp.cos(A)], axis=0)        # (2C, W)
    a_tiled = jnp.tile(a_tab, (1, th))                                # (2C, tile_s)
    b_tab = jnp.concatenate([jnp.sin(B), jnp.cos(B)], axis=0)        # (2C, H)
    b3 = b_tab.reshape(two_c, grid_n, th).transpose(1, 0, 2)          # (grid_n, 2C, th)
    # one-hot selection matrix: sel[k, s] = 1 iff s // W == k
    lane = jnp.arange(tile_s, dtype=jnp.int32) // W
    sel = (lane[None, :] == jnp.arange(th, dtype=jnp.int32)[:, None]).astype(jnp.float32)

    # --- explicit VMEM budget (double-buffered blocks) -------------------------
    out_block = two_c * tile_s * 4
    a_block = two_c * tile_s * 4
    sel_block = th * tile_s * 4
    b_block = two_c * th * 4
    vmem_need = 2 * (out_block + a_block + sel_block + b_block) + (1 << 20)
    vmem_limit = min(max(vmem_need, 16 << 20), 32 << 20)

    out_flat = pl.pallas_call(
        _pe_kernel,
        out_shape=jax.ShapeDtypeStruct((two_c, H * W), out_dtype),
        grid=(grid_n,),
        in_specs=[
            pl.BlockSpec((two_c, tile_s), lambda i: (0, 0)),   # A tables (invariant)
            pl.BlockSpec((1, two_c, th), lambda i: (i, 0, 0)),  # B tables (per tile)
            pl.BlockSpec((th, tile_s), lambda i: (0, 0)),       # one-hot (invariant)
        ],
        out_specs=pl.BlockSpec((two_c, tile_s), lambda i: (0, i)),
        compiler_params=pltpu.CompilerParams(
            dimension_semantics=("parallel",),
            vmem_limit_bytes=vmem_limit,
        ),
    )(a_tiled, b3, sel)

    # Contiguous (free) reshape to the PyTorch CHW output; no transpose pass.
    return out_flat.reshape(two_c, H, W)


def _reference(gaussian_matrix, size):
    """Pure-JAX reference mirroring the PyTorch forward exactly."""
    H, W = size
    grid = jnp.ones((H, W), jnp.float32)
    y_embed = (jnp.cumsum(grid, axis=0) - 0.5) / H
    x_embed = (jnp.cumsum(grid, axis=1) - 0.5) / W
    coords = jnp.stack([x_embed, y_embed], axis=-1)           # (H, W, 2)
    coords = 2.0 * coords - 1.0
    coords = coords @ gaussian_matrix                          # (H, W, C)
    coords = 2.0 * jnp.pi * coords
    pe = jnp.concatenate([jnp.sin(coords), jnp.cos(coords)], axis=-1)
    return jnp.transpose(pe, (2, 0, 1))


# TODO(synk): forward_with_coords (point-prompt variant) is not implemented; only
# the grid forward(size) path is covered here.


if __name__ == "__main__":
    num_pos_feats = 64
    scale = 1.0                                 # scale=None/<=0 -> 1.0 in the module
    H, W = 16, 16

    key = jax.random.PRNGKey(0)
    # deterministic stand-in for scale * torch.randn((2, num_pos_feats))
    gaussian_matrix = scale * jax.random.normal(key, (2, num_pos_feats), jnp.float32)

    pe = position_embedding_random(gaussian_matrix, (H, W))
    pe = jax.block_until_ready(pe)

    ref = _reference(gaussian_matrix, (H, W))
    assert pe.shape == (2 * num_pos_feats, H, W), pe.shape
    assert pe.dtype == jnp.float32
    # angle-addition identity vs direct sin/cos of the summed phase: a few 1e-6
    # of extra rounding on phases up to ~|2*pi*3| -> 1e-4 tolerance is ample.
    assert jnp.allclose(pe, ref, atol=1e-4, rtol=1e-4), "mismatch vs reference"

    print("KERNEL_OK")
</pallas_src>

<mosaic_0001>
module attributes {stable_mosaic.version = 11 : i64} {
  func.func @_pe_kernel(%arg0: i32, %arg1: memref<128x256xf32, #tpu.memory_space<vmem>>, %arg2: memref<1x128x16xf32, #tpu.memory_space<vmem>>, %arg3: memref<16x256xf32, #tpu.memory_space<vmem>>, %arg4: memref<128x256xf32, #tpu.memory_space<vmem>>) attributes {dimension_semantics = [#tpu.dimension_semantics<parallel>], iteration_bounds = array<i64: 1>, scalar_prefetch = 0 : i64, scratch_operands = 0 : i64, tpu.core_type = #tpu.core_type<tc>, window_params = [{pipeline_mode = #tpu.pipeline_mode<synchronous>, transform_indices = @transform_0, window_bounds = array<i64: 128, 256>}, {transform_indices = @transform_1, window_bounds = array<i64: 1, 128, 16>}, {pipeline_mode = #tpu.pipeline_mode<synchronous>, transform_indices = @transform_2, window_bounds = array<i64: 16, 256>}, {transform_indices = @transform_3, window_bounds = array<i64: 128, 256>}]} {
    %c0 = arith.constant 0 : index
    %c0_0 = arith.constant 0 : index
    %0 = vector.load %arg1[%c0, %c0_0] : memref<128x256xf32, #tpu.memory_space<vmem>>, vector<64x256xf32>
    %c64 = arith.constant 64 : index
    %c0_1 = arith.constant 0 : index
    %1 = vector.load %arg1[%c64, %c0_1] : memref<128x256xf32, #tpu.memory_space<vmem>>, vector<64x256xf32>
    %c0_2 = arith.constant 0 : index
    %c0_3 = arith.constant 0 : index
    %c0_4 = arith.constant 0 : index
    %2 = vector.load %arg2[%c0_2, %c0_3, %c0_4] : memref<1x128x16xf32, #tpu.memory_space<vmem>>, vector<1x128x16xf32>
    %3 = vector.shape_cast %2 : vector<1x128x16xf32> to vector<128x16xf32>
    %c0_5 = arith.constant 0 : index
    %c0_6 = arith.constant 0 : index
    %4 = vector.load %arg3[%c0_5, %c0_6] : memref<16x256xf32, #tpu.memory_space<vmem>>, vector<16x256xf32>
    %cst = arith.constant dense<0.000000e+00> : vector<128x256xf32>
    %5 = tpu.matmul %3, %4, %cst {dimension_numbers = #tpu.dot_dimension_numbers<[1], [0], [0], [1], [0, 0, 1, 1], [], []>} : vector<128x16xf32>, vector<16x256xf32>, vector<128x256xf32> -> vector<128x256xf32>
    %6 = vector.extract_strided_slice %5 {offsets = [0, 0], sizes = [64, 256], strides = [1, 1]} : vector<128x256xf32> to vector<64x256xf32>
    %7 = vector.extract_strided_slice %5 {offsets = [64, 0], sizes = [64, 256], strides = [1, 1]} : vector<128x256xf32> to vector<64x256xf32>
    %8 = arith.mulf %0, %7 : vector<64x256xf32>
    %9 = arith.mulf %1, %6 : vector<64x256xf32>
    %10 = arith.addf %8, %9 : vector<64x256xf32>
    %c0_7 = arith.constant 0 : index
    %c0_8 = arith.constant 0 : index
    %11 = vector.load %arg4[%c0_7, %c0_8] : memref<128x256xf32, #tpu.memory_space<vmem>>, vector<64x256xf32>
    tpu.vector_store %arg4[%c0_7, %c0_8], %10 {strides = array<i32>} : memref<128x256xf32, #tpu.memory_space<vmem>>, vector<64x256xf32>,
    %12 = arith.mulf %1, %7 : vector<64x256xf32>
    %13 = arith.mulf %0, %6 : vector<64x256xf32>
    %14 = arith.subf %12, %13 : vector<64x256xf32>
    %c64_9 = arith.constant 64 : index
    %c0_10 = arith.constant 0 : index
    %15 = vector.load %arg4[%c64_9, %c0_10] : memref<128x256xf32, #tpu.memory_space<vmem>>, vector<64x256xf32>
    tpu.vector_store %arg4[%c64_9, %c0_10], %14 {strides = array<i32>} : memref<128x256xf32, #tpu.memory_space<vmem>>, vector<64x256xf32>,
    return
  }
  func.func @transform_0(%arg0: i32) -> (i32, i32) {
    %c0_i32 = arith.constant 0 : i32
    %c0_i32_0 = arith.constant 0 : i32
    %c0_i32_1 = arith.constant 0 : i32
    return %c0_i32, %c0_i32_0 : i32, i32
  }
  func.func @transform_1(%arg0: i32) -> (i32, i32, i32) {
    %c0_i32 = arith.constant 0 : i32
    %c0_i32_0 = arith.constant 0 : i32
    %c0_i32_1 = arith.constant 0 : i32
    return %arg0, %c0_i32, %c0_i32_0 : i32, i32, i32
  }
  func.func @transform_2(%arg0: i32) -> (i32, i32) {
    %c0_i32 = arith.constant 0 : i32
    %c0_i32_0 = arith.constant 0 : i32
    %c0_i32_1 = arith.constant 0 : i32
    return %c0_i32, %c0_i32_0 : i32, i32
  }
  func.func @transform_3(%arg0: i32) -> (i32, i32) {
    %c0_i32 = arith.constant 0 : i32
    %c0_i32_0 = arith.constant 0 : i32
    return %c0_i32, %arg0 : i32, i32
  }
}

</mosaic_0001>

<llo_original>
// kernel: tpu_custom_call.1
$region0: #{tpu_custom_call.1}
  #allocation0 [shape = 'u32[]', space=smem, size = 0x4, offset = 0x4, fixed_abs, tag = 'smem constant byte address 0x4 - core index']
  #allocation1 [shape = 'u32[144,128]{1,0:T(1,128)}', space=vmem, size = 0x12000, scoped, tag = 'internal scratch']
  %s0 = inlined_call_operand.hbm [shape: f32[128,256], index: 0, kind: input, shape index: {}]
  %s1 = inlined_call_operand.vmem [shape: f32[1,128,16], index: 1, kind: input, shape index: {}]
  %s2 = inlined_call_operand.vmem [shape: f32[16,256], index: 2, kind: input, shape index: {}]
  %s3 = inlined_call_operand.hbm [shape: f32[128,256], index: 3, kind: output, shape index: {}]
  %s4 = sld [smem:[#allocation0]]
  $region26: #{tpu_custom_call.1} parent=0
    _
  %s6 = ssub.s32 1, %s4
  %s7 = scalar_select 0, %s6, %s4
  $region1: #{tpu_custom_call.1} parent=0
    #allocation2 [shape = 'u8[131072]{0}', space=vmem, size = 0x20000, scoped, tag = 'input window, operand 0, single buffered']
    #allocation3 [shape = 's32[1]{0}', space=sflag, size = 0x4, scoped, tag = 'scoped memory for tpu_custom_call.1']
    #allocation4 [shape = 's32[1]{0}', space=sflag, size = 0x4, scoped, tag = 'scoped memory for tpu_custom_call.1']
    #allocation5 [shape = 'u8[131072]{0}', space=vmem, size = 0x20000, scoped, tag = 'output window, operand 0, single buffered']
    %8 = vsyncpa [#allocation3], 0
    %9 = vsyncpa [#allocation4], 0
    // Predicated region
    $region2: #{tpu_custom_call.1} parent=1 // pred_check
      _
    $region3: #{tpu_custom_call.1} parent=1 // pred_check_branch
      %11 = sbr.rel (0) target = $region5
    $region4: #{tpu_custom_call.1} parent=1 // pred_region
      %s13 = ssub.s32 4096, 4096
      %14 = vsyncadd [#allocation3], %s13
      %s15 = sshll.u32 [#allocation2], 4
      %s16 = int_to_ptr.vmem [resolvable:$true] %s15
      %21 = dma.hbm_to_vmem [thread:$0]  %s0, 4096, %s16, [#allocation3], 256, 256, 16
    $region5: #{tpu_custom_call.1} parent=1 // pred_fallthru
      _
    // Predicated region
    $region6: #{tpu_custom_call.1} parent=1 // pred_check
      _
    $region7: #{tpu_custom_call.1} parent=1 // pred_check_branch
      %23 = sbr.rel (0) target = $region9
    $region8: #{tpu_custom_call.1} parent=1 // pred_region
      _
    $region9: #{tpu_custom_call.1} parent=1 // pred_fallthru
      _
    // Predicated region
    $region10: #{tpu_custom_call.1} parent=1 // pred_check
      _
    $region11: #{tpu_custom_call.1} parent=1 // pred_check_branch
      %25 = sbr.rel (0) target = $region13
    $region12: #{tpu_custom_call.1} parent=1 // pred_region
      _
    $region13: #{tpu_custom_call.1} parent=1 // pred_fallthru
      _
    // Predicated region
    $region14: #{tpu_custom_call.1} parent=1 // pred_check
      _
    $region15: #{tpu_custom_call.1} parent=1 // pred_check_branch
      %27 = sbr.rel (0) target = $region17
    $region16: #{tpu_custom_call.1} parent=1 // pred_region
      %28 = dma.done [#allocation3], 4096
    $region17: #{tpu_custom_call.1} parent=1 // pred_fallthru
      _
    %v29 = vld [vmem:[#allocation2] sm:$0xff]
    %v30 = vld [vmem:[#allocation2 + $0x8] sm:$0xff]
    %v31 = vld [vmem:[#allocation2 + $0x10] sm:$0xff]
    %v32 = vld [vmem:[#allocation2 + $0x18] sm:$0xff]
    %v33 = vld [vmem:[#allocation2 + $0x20] sm:$0xff]
    %v34 = vld [vmem:[#allocation2 + $0x28] sm:$0xff]
    %v35 = vld [vmem:[#allocation2 + $0x30] sm:$0xff]
    %v36 = vld [vmem:[#allocation2 + $0x38] sm:$0xff]
    %v37 = vld [vmem:[#allocation2 + $0x40] sm:$0xff]
    %v38 = vld [vmem:[#allocation2 + $0x48] sm:$0xff]
    %v39 = vld [vmem:[#allocation2 + $0x50] sm:$0xff]
    %v40 = vld [vmem:[#allocation2 + $0x58] sm:$0xff]
    %v41 = vld [vmem:[#allocation2 + $0x60] sm:$0xff]
    %v42 = vld [vmem:[#allocation2 + $0x68] sm:$0xff]
    %v43 = vld [vmem:[#allocation2 + $0x70] sm:$0xff]
    %v44 = vld [vmem:[#allocation2 + $0x78] sm:$0xff]
    %v45 = vld [vmem:[#allocation2 + $0x80] sm:$0xff]
    %v46 = vld [vmem:[#allocation2 + $0x88] sm:$0xff]
    %v47 = vld [vmem:[#allocation2 + $0x90] sm:$0xff]
    %v48 = vld [vmem:[#allocation2 + $0x98] sm:$0xff]
    %v49 = vld [vmem:[#allocation2 + $0xa0] sm:$0xff]
    %v50 = vld [vmem:[#allocation2 + $0xa8] sm:$0xff]
    %v51 = vld [vmem:[#allocation2 + $0xb0] sm:$0xff]
    %v52 = vld [vmem:[#allocation2 + $0xb8] sm:$0xff]
    %v53 = vld [vmem:[#allocation2 + $0xc0] sm:$0xff]
    %v54 = vld [vmem:[#allocation2 + $0xc8] sm:$0xff]
    %v55 = vld [vmem:[#allocation2 + $0xd0] sm:$0xff]
    %v56 = vld [vmem:[#allocation2 + $0xd8] sm:$0xff]
    %v57 = vld [vmem:[#allocation2 + $0xe0] sm:$0xff]
    %v58 = vld [vmem:[#allocation2 + $0xe8] sm:$0xff]
    %v59 = vld [vmem:[#allocation2 + $0xf0] sm:$0xff]
    %v60 = vld [vmem:[#allocation2 + $0xf8] sm:$0xff]
    %v61 = vld [vmem:[%s1] sm:$0xff]
    %v62 = vld [vmem:[%s1 + $0x8] sm:$0xff]
    %v63 = vld [vmem:[%s1 + $0x10] sm:$0xff]
    %v64 = vld [vmem:[%s1 + $0x18] sm:$0xff]
    %v65 = vld [vmem:[%s1 + $0x20] sm:$0xff]
    %v66 = vld [vmem:[%s1 + $0x28] sm:$0xff]
    %v67 = vld [vmem:[%s1 + $0x30] sm:$0xff]
    %v68 = vld [vmem:[%s1 + $0x38] sm:$0xff]
    %v69 = vld [vmem:[%s1 + $0x40] sm:$0xff]
    %v70 = vld [vmem:[%s1 + $0x48] sm:$0xff]
    %v71 = vld [vmem:[%s1 + $0x50] sm:$0xff]
    %v72 = vld [vmem:[%s1 + $0x58] sm:$0xff]
    %v73 = vld [vmem:[%s1 + $0x60] sm:$0xff]
    %v74 = vld [vmem:[%s1 + $0x68] sm:$0xff]
    %v75 = vld [vmem:[%s1 + $0x70] sm:$0xff]
    %v76 = vld [vmem:[%s1 + $0x78] sm:$0xff]
    %v77 = vld [vmem:[%s2] sm:$0xff]
    %v78 = vld [vmem:[%s2 + $0x8] sm:$0xff]
    %v79 = vld [vmem:[%s2 + $0x10] sm:$0xff]
    %v80 = vld [vmem:[%s2 + $0x18] sm:$0xff]
    %vm81 = vcmask 130048
    %v83 = vsel %vm81, %v61, 0
    %v86 = vsel %vm81, %v62, 0
    %v89 = vsel %vm81, %v63, 0
    %v92 = vsel %vm81, %v64, 0
    %v95 = vsel %vm81, %v65, 0
    %v98 = vsel %vm81, %v66, 0
    %v101 = vsel %vm81, %v67, 0
    %v104 = vsel %vm81, %v68, 0
    %v107 = vsel %vm81, %v69, 0
    %v110 = vsel %vm81, %v70, 0
    %v113 = vsel %vm81, %v71, 0
    %v116 = vsel %vm81, %v72, 0
    %v119 = vsel %vm81, %v73, 0
    %v122 = vsel %vm81, %v74, 0
    %v125 = vsel %vm81, %v75, 0
    %v128 = vsel %vm81, %v76, 0
    %130 = vmatprep.subr.mxu0 0.0
    %131 = vmatpush1.msra.mxu0 0.0
    %132 = vmatprep.subr.mxu0 0.0
    %133 = vmatpush1.msra.mxu0 0.0
    %134 = vmatprep.subr.mxu0 0.0
    %135 = vmatpush1.msra.mxu0 0.0
    %136 = vmatprep.subr.mxu0 0.0
    %137 = vmatpush1.msra.mxu0 0.0
    %138 = vmatprep.subr.mxu0 0.0
    %139 = vmatpush1.msra.mxu0 0.0
    %140 = vmatprep.subr.mxu0 0.0
    %141 = vmatpush1.msra.mxu0 0.0
    %142 = vmatprep.subr.mxu0 0.0
    %143 = vmatpush1.msra.mxu0 0.0
    %144 = vmatprep.subr.mxu0 0.0
    %145 = vmatpush1.msra.mxu0 0.0
    %146 = vmatprep.subr.mxu0 0.0
    %147 = vmatpush1.msra.mxu0 0.0
    %148 = vmatprep.subr.mxu0 0.0
    %149 = vmatpush1.msra.mxu0 0.0
    %150 = vmatprep.subr.mxu0 0.0
    %151 = vmatpush1.msra.mxu0 0.0
    %152 = vmatprep.subr.mxu0 0.0
    %153 = vmatpush1.msra.mxu0 0.0
    %154 = vmatprep.subr.mxu0 0.0
    %155 = vmatpush1.msra.mxu0 0.0
    %156 = vmatprep.subr.mxu0 0.0
    %157 = vmatpush1.msra.mxu0 0.0
    %158 = vmatprep.subr.mxu0 %v80
    %159 = vmatpush1.msra.mxu0 %v79
    %160 = vmatprep.subr.mxu0 %v78
    %161 = vmatpush1.msra.mxu0 %v77
    %162 = vmatprep.subr.mxu0 0.0
    %163 = vmatpush2.msra.mxu0 0.0
    %164 = vmatprep.subr.mxu0 0.0
    %165 = vmatpush2.msra.mxu0 0.0
    %166 = vmatprep.subr.mxu0 0.0
    %167 = vmatpush2.msra.mxu0 0.0
    %168 = vmatprep.subr.mxu0 0.0
    %169 = vmatpush2.msra.mxu0 0.0
    %170 = vmatprep.subr.mxu0 0.0
    %171 = vmatpush2.msra.mxu0 0.0
    %172 = vmatprep.subr.mxu0 0.0
    %173 = vmatpush2.msra.mxu0 0.0
    %174 = vmatprep.subr.mxu0 0.0
    %175 = vmatpush2.msra.mxu0 0.0
    %176 = vmatprep.subr.mxu0 0.0
    %177 = vmatpush2.msra.mxu0 0.0
    %178 = vmatprep.subr.mxu0 0.0
    %179 = vmatpush2.msra.mxu0 0.0
    %180 = vmatprep.subr.mxu0 0.0
    %181 = vmatpush2.msra.mxu0 0.0
    %182 = vmatprep.subr.mxu0 0.0
    %183 = vmatpush2.msra.mxu0 0.0
    %184 = vmatprep.subr.mxu0 0.0
    %185 = vmatpush2.msra.mxu0 0.0
    %186 = vmatprep.subr.mxu0 0.0
    %187 = vmatpush2.msra.mxu0 0.0
    %188 = vmatprep.subr.mxu0 0.0
    %189 = vmatpush2.msra.mxu0 0.0
    %190 = vmatprep.subr.mxu0 0.0
    %191 = vmatpush2.msra.mxu0 0.0
    %192 = vmatprep.subr.mxu0 0.0
    %193 = vmatpush2.msra.mxu0 0.0
    %194 = vmatprep.mubr.f32.mxu0 0.0
    %195 = vmatmul.mubr.f32.gmra.mxu0 %v83
    %v196 = vpop.f32.mrf.mxu0
    %v197 = vadd.f32 0.0, %v196
    %v198 = vpop.f32.mrf.mxu0
    %v199 = vadd.f32 0.0, %v198
    %200 = vmatprep.mubr.f32.mxu0 0.0
    %201 = vmatmul.mubr.f32.gmra.mxu0 %v86
    %v202 = vpop.f32.mrf.mxu0
    %v203 = vadd.f32 0.0, %v202
    %v204 = vpop.f32.mrf.mxu0
    %v205 = vadd.f32 0.0, %v204
    %206 = vmatprep.mubr.f32.mxu0 0.0
    %207 = vmatmul.mubr.f32.gmra.mxu0 %v89
    %v208 = vpop.f32.mrf.mxu0
    %v209 = vadd.f32 0.0, %v208
    %v210 = vpop.f32.mrf.mxu0
    %v211 = vadd.f32 0.0, %v210
    %212 = vmatprep.mubr.f32.mxu0 0.0
    %213 = vmatmul.mubr.f32.gmra.mxu0 %v92
    %v214 = vpop.f32.mrf.mxu0
    %v215 = vadd.f32 0.0, %v214
    %v216 = vpop.f32.mrf.mxu0
    %v217 = vadd.f32 0.0, %v216
    %218 = vmatprep.mubr.f32.mxu0 0.0
    %219 = vmatmul.mubr.f32.gmra.mxu0 %v95
    %v220 = vpop.f32.mrf.mxu0
    %v221 = vadd.f32 0.0, %v220
    %v222 = vpop.f32.mrf.mxu0
    %v223 = vadd.f32 0.0, %v222
    %224 = vmatprep.mubr.f32.mxu0 0.0
    %225 = vmatmul.mubr.f32.gmra.mxu0 %v98
    %v226 = vpop.f32.mrf.mxu0
    %v227 = vadd.f32 0.0, %v226
    %v228 = vpop.f32.mrf.mxu0
    %v229 = vadd.f32 0.0, %v228
    %230 = vmatprep.mubr.f32.mxu0 0.0
    %231 = vmatmul.mubr.f32.gmra.mxu0 %v101
    %v232 = vpop.f32.mrf.mxu0
    %v233 = vadd.f32 0.0, %v232
    %v234 = vpop.f32.mrf.mxu0
    %v235 = vadd.f32 0.0, %v234
    %236 = vmatprep.mubr.f32.mxu0 0.0
    %237 = vmatmul.mubr.f32.gmra.mxu0 %v104
    %v238 = vpop.f32.mrf.mxu0
    %v239 = vadd.f32 0.0, %v238
    %v240 = vpop.f32.mrf.mxu0
    %v241 = vadd.f32 0.0, %v240
    %242 = vmatprep.mubr.f32.mxu0 0.0
    %243 = vmatmul.mubr.f32.gmra.mxu0 %v107
    %v244 = vpop.f32.mrf.mxu0
    %v245 = vadd.f32 0.0, %v244
    %v246 = vpop.f32.mrf.mxu0
    %v247 = vadd.f32 0.0, %v246
    %248 = vmatprep.mubr.f32.mxu0 0.0
    %249 = vmatmul.mubr.f32.gmra.mxu0 %v110
    %v250 = vpop.f32.mrf.mxu0
    %v251 = vadd.f32 0.0, %v250
    %v252 = vpop.f32.mrf.mxu0
    %v253 = vadd.f32 0.0, %v252
    %254 = vmatprep.mubr.f32.mxu0 0.0
    %255 = vmatmul.mubr.f32.gmra.mxu0 %v113
    %v256 = vpop.f32.mrf.mxu0
    %v257 = vadd.f32 0.0, %v256
    %v258 = vpop.f32.mrf.mxu0
    %v259 = vadd.f32 0.0, %v258
    %260 = vmatprep.mubr.f32.mxu0 0.0
    %261 = vmatmul.mubr.f32.gmra.mxu0 %v116
    %v262 = vpop.f32.mrf.mxu0
    %v263 = vadd.f32 0.0, %v262
    %v264 = vpop.f32.mrf.mxu0
    %v265 = vadd.f32 0.0, %v264
    %266 = vmatprep.mubr.f32.mxu0 0.0
    %267 = vmatmul.mubr.f32.gmra.mxu0 %v119
    %v268 = vpop.f32.mrf.mxu0
    %v269 = vadd.f32 0.0, %v268
    %v270 = vpop.f32.mrf.mxu0
    %v271 = vadd.f32 0.0, %v270
    %272 = vmatprep.mubr.f32.mxu0 0.0
    %273 = vmatmul.mubr.f32.gmra.mxu0 %v122
    %v274 = vpop.f32.mrf.mxu0
    %v275 = vadd.f32 0.0, %v274
    %v276 = vpop.f32.mrf.mxu0
    %v277 = vadd.f32 0.0, %v276
    %278 = vmatprep.mubr.f32.mxu0 0.0
    %279 = vmatmul.mubr.f32.gmra.mxu0 %v125
    %v280 = vpop.f32.mrf.mxu0
    %v281 = vadd.f32 0.0, %v280
    %v282 = vpop.f32.mrf.mxu0
    %v283 = vadd.f32 0.0, %v282
    %284 = vmatprep.mubr.f32.mxu0 0.0
    %285 = vmatmul.mubr.f32.gmra.mxu0 %v128
    %v286 = vpop.f32.mrf.mxu0
    %v287 = vadd.f32 0.0, %v286
    %v288 = vpop.f32.mrf.mxu0
    %v289 = vadd.f32 0.0, %v288
    %290 = vdwg.mxu0
    %v291 = vmul.f32 %v29, %v245
    %v292 = vmul.f32 %v30, %v247
    %v293 = vmul.f32 %v31, %v251
    %v294 = vmul.f32 %v32, %v253
    %v295 = vmul.f32 %v33, %v257
    %v296 = vmul.f32 %v34, %v259
    %v297 = vmul.f32 %v35, %v263
    %v298 = vmul.f32 %v36, %v265
    %v299 = vmul.f32 %v37, %v269
    %v300 = vmul.f32 %v38, %v271
    %v301 = vmul.f32 %v39, %v275
    %v302 = vmul.f32 %v40, %v277
    %v303 = vmul.f32 %v41, %v281
    %v304 = vmul.f32 %v42, %v283
    %v305 = vmul.f32 %v43, %v287
    %v306 = vmul.f32 %v44, %v289
    %v307 = vmul.f32 %v45, %v197
    %v308 = vmul.f32 %v46, %v199
    %v309 = vmul.f32 %v47, %v203
    %v310 = vmul.f32 %v48, %v205
    %v311 = vmul.f32 %v49, %v209
    %v312 = vmul.f32 %v50, %v211
    %v313 = vmul.f32 %v51, %v215
    %v314 = vmul.f32 %v52, %v217
    %v315 = vmul.f32 %v53, %v221
    %v316 = vmul.f32 %v54, %v223
    %v317 = vmul.f32 %v55, %v227
    %v318 = vmul.f32 %v56, %v229
    %v319 = vmul.f32 %v57, %v233
    %v320 = vmul.f32 %v58, %v235
    %v321 = vmul.f32 %v59, %v239
    %v322 = vmul.f32 %v60, %v241
    %v323 = vadd.f32 %v291, %v307
    %v324 = vadd.f32 %v292, %v308
    %v325 = vadd.f32 %v293, %v309
    %v326 = vadd.f32 %v294, %v310
    %v327 = vadd.f32 %v295, %v311
    %v328 = vadd.f32 %v296, %v312
    %v329 = vadd.f32 %v297, %v313
    %v330 = vadd.f32 %v298, %v314
    %v331 = vadd.f32 %v299, %v315
    %v332 = vadd.f32 %v300, %v316
    %v333 = vadd.f32 %v301, %v317
    %v334 = vadd.f32 %v302, %v318
    %v335 = vadd.f32 %v303, %v319
    %v336 = vadd.f32 %v304, %v320
    %v337 = vadd.f32 %v305, %v321
    %v338 = vadd.f32 %v306, %v322
    %339 = vst [vmem:[#allocation5] sm:$0xff] %v323
    %340 = vst [vmem:[#allocation5 + $0x8] sm:$0xff] %v324
    %341 = vst [vmem:[#allocation5 + $0x10] sm:$0xff] %v325
    %342 = vst [vmem:[#allocation5 + $0x18] sm:$0xff] %v326
    %343 = vst [vmem:[#allocation5 + $0x20] sm:$0xff] %v327
    %344 = vst [vmem:[#allocation5 + $0x28] sm:$0xff] %v328
    %345 = vst [vmem:[#allocation5 + $0x30] sm:$0xff] %v329
    %346 = vst [vmem:[#allocation5 + $0x38] sm:$0xff] %v330
    %347 = vst [vmem:[#allocation5 + $0x40] sm:$0xff] %v331
    %348 = vst [vmem:[#allocation5 + $0x48] sm:$0xff] %v332
    %349 = vst [vmem:[#allocation5 + $0x50] sm:$0xff] %v333
    %350 = vst [vmem:[#allocation5 + $0x58] sm:$0xff] %v334
    %351 = vst [vmem:[#allocation5 + $0x60] sm:$0xff] %v335
    %352 = vst [vmem:[#allocation5 + $0x68] sm:$0xff] %v336
    %353 = vst [vmem:[#allocation5 + $0x70] sm:$0xff] %v337
    %354 = vst [vmem:[#allocation5 + $0x78] sm:$0xff] %v338
    %v355 = vmul.f32 %v45, %v245
    %v356 = vmul.f32 %v46, %v247
    %v357 = vmul.f32 %v47, %v251
    %v358 = vmul.f32 %v48, %v253
    %v359 = vmul.f32 %v49, %v257
    %v360 = vmul.f32 %v50, %v259
    %v361 = vmul.f32 %v51, %v263
    %v362 = vmul.f32 %v52, %v265
    %v363 = vmul.f32 %v53, %v269
    %v364 = vmul.f32 %v54, %v271
    %v365 = vmul.f32 %v55, %v275
    %v366 = vmul.f32 %v56, %v277
    %v367 = vmul.f32 %v57, %v281
    %v368 = vmul.f32 %v58, %v283
    %v369 = vmul.f32 %v59, %v287
    %v370 = vmul.f32 %v60, %v289
    %v371 = vmul.f32 %v29, %v197
    %v372 = vmul.f32 %v30, %v199
    %v373 = vmul.f32 %v31, %v203
    %v374 = vmul.f32 %v32, %v205
    %v375 = vmul.f32 %v33, %v209
    %v376 = vmul.f32 %v34, %v211
    %v377 = vmul.f32 %v35, %v215
    %v378 = vmul.f32 %v36, %v217
    %v379 = vmul.f32 %v37, %v221
    %v380 = vmul.f32 %v38, %v223
    %v381 = vmul.f32 %v39, %v227
    %v382 = vmul.f32 %v40, %v229
    %v383 = vmul.f32 %v41, %v233
    %v384 = vmul.f32 %v42, %v235
    %v385 = vmul.f32 %v43, %v239
    %v386 = vmul.f32 %v44, %v241
    %v387 = vsub.f32 %v355, %v371
    %v388 = vsub.f32 %v356, %v372
    %v389 = vsub.f32 %v357, %v373
    %v390 = vsub.f32 %v358, %v374
    %v391 = vsub.f32 %v359, %v375
    %v392 = vsub.f32 %v360, %v376
    %v393 = vsub.f32 %v361, %v377
    %v394 = vsub.f32 %v362, %v378
    %v395 = vsub.f32 %v363, %v379
    %v396 = vsub.f32 %v364, %v380
    %v397 = vsub.f32 %v365, %v381
    %v398 = vsub.f32 %v366, %v382
    %v399 = vsub.f32 %v367, %v383
    %v400 = vsub.f32 %v368, %v384
    %v401 = vsub.f32 %v369, %v385
    %v402 = vsub.f32 %v370, %v386
    %403 = vst [vmem:[#allocation5 + $0x80] sm:$0xff] %v387
    %404 = vst [vmem:[#allocation5 + $0x88] sm:$0xff] %v388
    %405 = vst [vmem:[#allocation5 + $0x90] sm:$0xff] %v389
    %406 = vst [vmem:[#allocation5 + $0x98] sm:$0xff] %v390
    %407 = vst [vmem:[#allocation5 + $0xa0] sm:$0xff] %v391
    %408 = vst [vmem:[#allocation5 + $0xa8] sm:$0xff] %v392
    %409 = vst [vmem:[#allocation5 + $0xb0] sm:$0xff] %v393
    %410 = vst [vmem:[#allocation5 + $0xb8] sm:$0xff] %v394
    %411 = vst [vmem:[#allocation5 + $0xc0] sm:$0xff] %v395
    %412 = vst [vmem:[#allocation5 + $0xc8] sm:$0xff] %v396
    %413 = vst [vmem:[#allocation5 + $0xd0] sm:$0xff] %v397
    %414 = vst [vmem:[#allocation5 + $0xd8] sm:$0xff] %v398
    %415 = vst [vmem:[#allocation5 + $0xe0] sm:$0xff] %v399
    %416 = vst [vmem:[#allocation5 + $0xe8] sm:$0xff] %v400
    %417 = vst [vmem:[#allocation5 + $0xf0] sm:$0xff] %v401
    %418 = vst [vmem:[#allocation5 + $0xf8] sm:$0xff] %v402
    // Predicated region
    $region18: #{tpu_custom_call.1} parent=1 // pred_check
      _
    $region19: #{tpu_custom_call.1} parent=1 // pred_check_branch
      %420 = sbr.rel (0) target = $region21
    $region20: #{tpu_custom_call.1} parent=1 // pred_region
      %s422 = ssub.s32 4096, 4096
      %423 = vsyncadd [#allocation4], %s422
      %s424 = sshll.u32 [#allocation5], 4
      %s425 = int_to_ptr.vmem [resolvable:$true] %s424
      %430 = dma.vmem_to_hbm [thread:$0]  %s425, 4096, %s3, [#allocation4], 256, 256, 16
    $region21: #{tpu_custom_call.1} parent=1 // pred_fallthru
      _
    // Predicated region
    $region22: #{tpu_custom_call.1} parent=1 // pred_check
      _
    $region23: #{tpu_custom_call.1} parent=1 // pred_check_branch
      %432 = sbr.rel (0) target = $region25
    $region24: #{tpu_custom_call.1} parent=1 // pred_region
      %433 = dma.done [#allocation4], 4096
    $region25: #{tpu_custom_call.1} parent=1 // pred_fallthru
      _
    %434 = vsyncpa [#allocation3], 1
    %435 = vsyncpa [#allocation4], 1

</llo_original>
